<compile_context>
chip_gen: v5e
topology: v5e:2x2
jax: 0.10.0
libtpu: 0.0.40
codegen_flags: <defaults>
</compile_context>

<pallas_src>
import functools

import jax
import jax.numpy as jnp
from jax.experimental import pallas as pl
from jax.experimental.pallas import tpu as pltpu

_LANES = 128
_SUBLANES = 8


def _ceil_div(a, b):
    return -(-a // b)


def _default_num_chunks():
    """One grid chunk per TensorCore (v5e/v6e: 1, v7x: 2). Best-effort query."""
    try:
        info = pltpu.get_tpu_info()
    except Exception:
        return 1
    for attr in ("num_cores", "core_count", "num_tensorcores",
                 "tensorcore_count", "num_tensor_cores", "cores_per_chip"):
        n = getattr(info, attr, None)
        if isinstance(n, int) and 1 <= n <= 8:
            return n
    return 1


def _mse_partial_kernel(scores_ref, labels_ref, acc_ref, *,
                        blocks_per_chunk, row_tile, acc_rows,
                        total_blocks, valid_rows, need_mask):
    """Accumulate sum((scores - labels.float())^2) for one chunk into an (acc_rows, 128) block."""
    c = pl.program_id(0)   # chunk axis ("parallel", one chunk per TensorCore)
    i = pl.program_id(1)   # row-block axis within the chunk ("arbitrary" / reduction)

    @pl.when(i == 0)
    def _():
        acc_ref[...] = jnp.zeros_like(acc_ref)

    def squared_error():
        # target_similarity = labels.float(); everything in f32 on the VPU.
        d = scores_ref[...].astype(jnp.float32) - labels_ref[...].astype(jnp.float32)
        return d * d

    def accumulate(sq):
        # Fold (row_tile, 128) -> (acc_rows, 128) with vreg-aligned VPU adds.
        # acc_rows = 64 keeps 8 independent add chains, so add latency stays
        # hidden under the per-step DMA even on v7x's 3.2 TB/s HBM.
        acc_ref[...] += jnp.sum(
            sq.reshape(row_tile // acc_rows, acc_rows, _LANES), axis=0)

    if not need_mask:
        accumulate(squared_error())
        return

    g = c * blocks_per_chunk + i                       # global row-block id (may overrun)
    block_is_full = g * row_tile + row_tile <= valid_rows

    @pl.when(block_is_full)
    def _():
        accumulate(squared_error())

    @pl.when(jnp.logical_not(block_is_full))
    def _():
        # Slow path: taken only by the partial last block and/or clamped duplicate
        # blocks (when num_chunks does not divide total_blocks). Rows past
        # `valid_rows` read unspecified VMEM contents; the select below discards
        # them before they can reach the accumulator, and duplicate blocks
        # (g >= total_blocks) contribute exactly zero.
        sq = squared_error()
        base_row = jnp.minimum(g, total_blocks - 1) * row_tile
        row_ids = base_row + jax.lax.broadcasted_iota(jnp.int32, sq.shape, 0)
        keep = jnp.logical_and(row_ids < valid_rows, g < total_blocks)
        accumulate(jnp.where(keep, sq, 0.0))


def similarity_loss(similarity_scores, labels, *, row_tile=8192, num_chunks=None):
    """mean((similarity_scores - labels.float())**2), computed with a Pallas TPU kernel.

    Tip: pass `labels` in their narrowest native dtype (bool / int8); the kernel
    upcasts in-VMEM, so narrow labels directly reduce HBM traffic.
    """
    assert similarity_scores.shape == labels.shape, "shape mismatch"
    total_n = int(similarity_scores.size)
    if total_n == 0:
        return jnp.array(jnp.nan, jnp.float32)   # matches F.mse_loss on empty input

    flat_s = similarity_scores.reshape(-1)
    flat_l = labels.reshape(-1)

    rows = total_n // _LANES            # full 128-lane rows handled by the kernel
    tail_n = total_n - rows * _LANES    # < 128 leftover elements handled in the wrapper

    total = jnp.zeros((), jnp.float32)

    if rows > 0:
        itemsize_sum = flat_s.dtype.itemsize + flat_l.dtype.itemsize

        if rows < 64:
            # Tiny input: one block equal to the full array extent (always legal),
            # no grid over rows, no masking.
            rt = rows
            acc_rows = rows
        else:
            # VMEM budget: keep the double-buffered input blocks under ~24 MiB total.
            cap_rows = max(64, (24 << 20) // (2 * _LANES * itemsize_sum))
            rt = min(int(row_tile), cap_rows, rows)
            rt = max(64, (rt // 64) * 64)   # multiple of 64: acc fold + int8/bool min-tile friendly
            acc_rows = 64

        total_blocks = _ceil_div(rows, rt)

        nc = _default_num_chunks() if num_chunks is None else int(num_chunks)
        nc = max(1, min(nc, total_blocks))
        blocks_per_chunk = _ceil_div(total_blocks, nc)

        need_clamp = nc * blocks_per_chunk > total_blocks
        need_mask = need_clamp or (total_blocks * rt != rows)

        if need_clamp:
            def block_map(c, i):
                return (jnp.minimum(c * blocks_per_chunk + i, total_blocks - 1), 0)
        else:
            def block_map(c, i):
                return (c * blocks_per_chunk + i, 0)

        # No full-array pad: only the 128-aligned prefix enters the kernel. When
        # total_n % 128 == 0 (common case) this is a pure bitcast reshape.
        if tail_n == 0:
            scores2d = flat_s.reshape(rows, _LANES)
            labels2d = flat_l.reshape(rows, _LANES)
        else:
            scores2d = flat_s[: rows * _LANES].reshape(rows, _LANES)
            labels2d = flat_l[: rows * _LANES].reshape(rows, _LANES)

        kernel = functools.partial(
            _mse_partial_kernel,
            blocks_per_chunk=blocks_per_chunk,
            row_tile=rt,
            acc_rows=acc_rows,
            total_blocks=total_blocks,
            valid_rows=rows,
            need_mask=need_mask,
        )

        # Explicit scoped-VMEM limit: covers double-buffered inputs + headroom,
        # above v5e's 16 MiB default and well under v7x's 64 MiB physical VMEM.
        block_in_bytes = rt * _LANES * itemsize_sum
        vmem_limit = int(min(40 << 20, max(16 << 20, 2 * block_in_bytes + (8 << 20))))

        partials = pl.pallas_call(
            kernel,
            out_shape=jax.ShapeDtypeStruct((nc * acc_rows, _LANES), jnp.float32),
            grid_spec=pltpu.PrefetchScalarGridSpec(
                num_scalar_prefetch=0,
                grid=(nc, blocks_per_chunk),
                in_specs=[
                    pl.BlockSpec((rt, _LANES), block_map),
                    pl.BlockSpec((rt, _LANES), block_map),
                ],
                # Each chunk's partial-sum block depends only on the chunk index,
                # so it stays VMEM-resident across the reduction axis.
                out_specs=pl.BlockSpec((acc_rows, _LANES), lambda c, i: (c, 0)),
            ),
            compiler_params=pltpu.CompilerParams(
                dimension_semantics=("parallel", "arbitrary"),
                vmem_limit_bytes=vmem_limit,
            ),
        )(scores2d, labels2d)

        total = total + jnp.sum(partials, dtype=jnp.float32)

    if tail_n > 0:
        ts = flat_s[rows * _LANES:].astype(jnp.float32)
        tl = flat_l[rows * _LANES:].astype(jnp.float32)
        total = total + jnp.sum((ts - tl) * (ts - tl), dtype=jnp.float32)

    # Final mean normalization (single tiny reduction already done above).
    return total / total_n


if __name__ == "__main__":
    key = jax.random.PRNGKey(0)
    k1, k2, k3, k4, k5, k6, k7, k8 = jax.random.split(key, 8)

    # 1) Primary example consistent with the module: similarity scores + integer labels.
    shape = (2, 4, 16, 16)
    scores = jax.random.normal(k1, shape, dtype=jnp.float32)
    labels = jax.random.randint(k2, shape, 0, 2, dtype=jnp.int32)
    loss = similarity_loss(scores, labels)
    jax.block_until_ready(loss)
    ref = jnp.mean((scores - labels.astype(jnp.float32)) ** 2)
    assert jnp.allclose(loss, ref, rtol=1e-5, atol=1e-6), (loss, ref)

    # 2) Multi-block / multi-chunk accumulation path (exact division, no masking).
    shape2 = (4, 8, 64, 32)
    scores2 = jax.random.normal(k3, shape2, dtype=jnp.float32)
    labels2 = jax.random.randint(k4, shape2, 0, 2, dtype=jnp.int32)
    loss2 = similarity_loss(scores2, labels2, row_tile=64, num_chunks=2)
    jax.block_until_ready(loss2)
    ref2 = jnp.mean((scores2 - labels2.astype(jnp.float32)) ** 2)
    assert jnp.allclose(loss2, ref2, rtol=1e-5, atol=1e-6), (loss2, ref2)

    # 3) Ragged element count + narrow (bf16) scores: exercises the full-array-dim
    #    single block and the wrapper-side <128-element tail (no full-array pad).
    shape3 = (2, 3, 999)
    scores3 = jax.random.normal(k5, shape3, dtype=jnp.bfloat16)
    labels3 = jax.random.randint(k6, shape3, 0, 2, dtype=jnp.int32)
    loss3 = similarity_loss(scores3, labels3)
    jax.block_until_ready(loss3)
    ref3 = jnp.mean((scores3.astype(jnp.float32) - labels3.astype(jnp.float32)) ** 2)
    assert jnp.allclose(loss3, ref3, rtol=1e-4, atol=1e-5), (loss3, ref3)

    # 4) Partial last block + clamped duplicate block + bool labels: exercises the
    #    pl.when-gated mask path and narrow-label HBM savings.
    shape4 = (2, 12000)
    scores4 = jax.random.normal(k7, shape4, dtype=jnp.float32)
    labels4 = jax.random.bernoulli(k8, 0.5, shape4)          # bool labels
    loss4 = similarity_loss(scores4, labels4, row_tile=64, num_chunks=2)
    jax.block_until_ready(loss4)
    ref4 = jnp.mean((scores4 - labels4.astype(jnp.float32)) ** 2)
    assert jnp.allclose(loss4, ref4, rtol=1e-5, atol=1e-6), (loss4, ref4)

    print("KERNEL_OK")
</pallas_src>

<mosaic_0001>
module attributes {stable_mosaic.version = 11 : i64} {
  func.func @_mse_partial_kernel(%arg0: i32, %arg1: i32, %arg2: memref<16x128xf32, #tpu.memory_space<vmem>>, %arg3: memref<16x128xi32, #tpu.memory_space<vmem>>, %arg4: memref<16x128xf32, #tpu.memory_space<vmem>>) attributes {dimension_semantics = [#tpu.dimension_semantics<parallel>, #tpu.dimension_semantics<arbitrary>], iteration_bounds = array<i64: 1, 1>, scalar_prefetch = 0 : i64, scratch_operands = 0 : i64, tpu.core_type = #tpu.core_type<tc>, window_params = [{transform_indices = @transform_0, window_bounds = array<i64: 16, 128>}, {transform_indices = @transform_1, window_bounds = array<i64: 16, 128>}, {transform_indices = @transform_2, window_bounds = array<i64: 16, 128>}]} {
    %c0_i32 = arith.constant 0 : i32
    %0 = arith.cmpi eq, %arg1, %c0_i32 : i32
    %1 = arith.extui %0 : i1 to i32
    %c0_i32_0 = arith.constant 0 : i32
    %2 = arith.cmpi ne, %1, %c0_i32_0 : i32
    scf.if %2 {
      %cst_8 = arith.constant 0.000000e+00 : f32
      %13 = vector.broadcast %cst_8 : f32 to vector<16x128xf32>
      %c0_9 = arith.constant 0 : index
      %c0_10 = arith.constant 0 : index
      %14 = vector.load %arg4[%c0_9, %c0_10] : memref<16x128xf32, #tpu.memory_space<vmem>>, vector<16x128xf32>
      tpu.vector_store %arg4[%c0_9, %c0_10], %13 {strides = array<i32>} : memref<16x128xf32, #tpu.memory_space<vmem>>, vector<16x128xf32>,
    } else {
    }
    %c0 = arith.constant 0 : index
    %c0_1 = arith.constant 0 : index
    %3 = vector.load %arg2[%c0, %c0_1] : memref<16x128xf32, #tpu.memory_space<vmem>>, vector<16x128xf32>
    %c0_2 = arith.constant 0 : index
    %c0_3 = arith.constant 0 : index
    %4 = vector.load %arg3[%c0_2, %c0_3] : memref<16x128xi32, #tpu.memory_space<vmem>>, vector<16x128xi32>
    %5 = arith.sitofp %4 : vector<16x128xi32> to vector<16x128xf32>
    %6 = arith.subf %3, %5 : vector<16x128xf32>
    %7 = arith.mulf %6, %6 : vector<16x128xf32>
    %c0_4 = arith.constant 0 : index
    %c0_5 = arith.constant 0 : index
    %8 = vector.load %arg4[%c0_4, %c0_5] : memref<16x128xf32, #tpu.memory_space<vmem>>, vector<16x128xf32>
    %9 = vector.shape_cast %7 : vector<16x128xf32> to vector<1x16x128xf32>
    %cst = arith.constant dense<0.000000e+00> : vector<16x128xf32>
    %10 = vector.multi_reduction <add>, %9, %cst [0] : vector<1x16x128xf32> to vector<16x128xf32>
    %11 = arith.addf %8, %10 : vector<16x128xf32>
    %c0_6 = arith.constant 0 : index
    %c0_7 = arith.constant 0 : index
    %12 = vector.load %arg4[%c0_6, %c0_7] : memref<16x128xf32, #tpu.memory_space<vmem>>, vector<16x128xf32>
    tpu.vector_store %arg4[%c0_6, %c0_7], %11 {strides = array<i32>} : memref<16x128xf32, #tpu.memory_space<vmem>>, vector<16x128xf32>,
    return
  }
  func.func @transform_0(%arg0: i32, %arg1: i32) -> (i32, i32) {
    %c1_i32 = arith.constant 1 : i32
    %0 = arith.muli %arg0, %c1_i32 : i32
    %1 = arith.addi %0, %arg1 : i32
    %c0_i32 = arith.constant 0 : i32
    %c0_i32_0 = arith.constant 0 : i32
    return %1, %c0_i32 : i32, i32
  }
  func.func @transform_1(%arg0: i32, %arg1: i32) -> (i32, i32) {
    %c1_i32 = arith.constant 1 : i32
    %0 = arith.muli %arg0, %c1_i32 : i32
    %1 = arith.addi %0, %arg1 : i32
    %c0_i32 = arith.constant 0 : i32
    %c0_i32_0 = arith.constant 0 : i32
    return %1, %c0_i32 : i32, i32
  }
  func.func @transform_2(%arg0: i32, %arg1: i32) -> (i32, i32) {
    %c0_i32 = arith.constant 0 : i32
    %c0_i32_0 = arith.constant 0 : i32
    return %arg0, %c0_i32 : i32, i32
  }
}

</mosaic_0001>

<llo_original>
// kernel: tpu_custom_call.1
$region0: #{tpu_custom_call.1}
  #allocation0 [shape = 'u32[]', space=smem, size = 0x4, offset = 0x4, fixed_abs, tag = 'smem constant byte address 0x4 - core index']
  #allocation1 [shape = 'u32[72,128]{1,0:T(1,128)}', space=vmem, size = 0x9000, scoped, tag = 'internal scratch']
  %s0 = inlined_call_operand.hbm [shape: f32[16,128], index: 0, kind: input, shape index: {}]
  %s1 = inlined_call_operand.hbm [shape: s32[16,128], index: 1, kind: input, shape index: {}]
  %s2 = inlined_call_operand.hbm [shape: f32[16,128], index: 2, kind: output, shape index: {}]
  %s3 = sld [smem:[#allocation0]]
  $region30: #{tpu_custom_call.1} parent=0
    _
  %s5 = ssub.s32 1, %s3
  %s6 = scalar_select 0, %s5, %s3
  $region1: #{tpu_custom_call.1} parent=0
    #allocation2 [shape = 'u8[8192]{0}', space=vmem, size = 0x2000, scoped, tag = 'input window, operand 0, single buffered']
    #allocation3 [shape = 's32[1]{0}', space=sflag, size = 0x4, scoped, tag = 'scoped memory for tpu_custom_call.1']
    #allocation4 [shape = 's32[1]{0}', space=sflag, size = 0x4, scoped, tag = 'scoped memory for tpu_custom_call.1']
    #allocation5 [shape = 'u8[8192]{0}', space=vmem, size = 0x2000, scoped, tag = 'input window, operand 1, single buffered']
    #allocation6 [shape = 's32[1]{0}', space=sflag, size = 0x4, scoped, tag = 'scoped memory for tpu_custom_call.1']
    #allocation7 [shape = 'u8[8192]{0}', space=vmem, size = 0x2000, scoped, tag = 'output window, operand 0, single buffered']
    %7 = vsyncpa [#allocation3], 0
    %8 = vsyncpa [#allocation6], 0
    %9 = vsyncpa [#allocation4], 0
    // Predicated region
    $region2: #{tpu_custom_call.1} parent=1 // pred_check
      _
    $region3: #{tpu_custom_call.1} parent=1 // pred_check_branch
      %11 = sbr.rel (0) target = $region5
    $region4: #{tpu_custom_call.1} parent=1 // pred_region
      %s12 = sadd.s32 0, 0
      %s13 = smul.u32 2, %s12
      %15 = vsyncadd [#allocation3], 0
      %s16 = smul.addr %s13, 8
      %s17 = scalar_lea.hbm %s0, %s16
      %s18 = sshll.u32 %s17, 4
      %s19 = int_to_ptr.hbm [resolvable:$true] %s18
      %s20 = sshll.u32 [#allocation2], 4
      %s21 = int_to_ptr.vmem [resolvable:$true] %s20
      %26 = dma.hbm_to_vmem [thread:$0]  %s19, 256, %s21, [#allocation3], 128, 128, 8
    $region5: #{tpu_custom_call.1} parent=1 // pred_fallthru
      _
    // Predicated region
    $region6: #{tpu_custom_call.1} parent=1 // pred_check
      _
    $region7: #{tpu_custom_call.1} parent=1 // pred_check_branch
      %28 = sbr.rel (0) target = $region9
    $region8: #{tpu_custom_call.1} parent=1 // pred_region
      %s29 = sadd.s32 0, 0
      %s30 = smul.u32 2, %s29
      %32 = vsyncadd [#allocation6], 0
      %s33 = smul.addr %s30, 8
      %s34 = scalar_lea.hbm %s1, %s33
      %s35 = sshll.u32 %s34, 4
      %s36 = int_to_ptr.hbm [resolvable:$true] %s35
      %s37 = sshll.u32 [#allocation5], 4
      %s38 = int_to_ptr.vmem [resolvable:$true] %s37
      %43 = dma.hbm_to_vmem [thread:$0]  %s36, 256, %s38, [#allocation6], 128, 128, 8
    $region9: #{tpu_custom_call.1} parent=1 // pred_fallthru
      _
    // Predicated region
    $region10: #{tpu_custom_call.1} parent=1 // pred_check
      _
    $region11: #{tpu_custom_call.1} parent=1 // pred_check_branch
      %45 = sbr.rel (0) target = $region13
    $region12: #{tpu_custom_call.1} parent=1 // pred_region
      %47 = dma.done [#allocation3], 256
    $region13: #{tpu_custom_call.1} parent=1 // pred_fallthru
      _
    // Predicated region
    $region14: #{tpu_custom_call.1} parent=1 // pred_check
      _
    $region15: #{tpu_custom_call.1} parent=1 // pred_check_branch
      %49 = sbr.rel (0) target = $region17
    $region16: #{tpu_custom_call.1} parent=1 // pred_region
      %51 = dma.done [#allocation6], 256
    $region17: #{tpu_custom_call.1} parent=1 // pred_fallthru
      _
    %s52 = sadd.s32 0, 0
    %s53 = smul.u32 2, %s52
    %s54 = sadd.s32 0, 0
    %s55 = smul.u32 2, %s54
    %p56 = scmp.eq.s32.totalorder 0, 0
    // Predicated region
    $region18: #{tpu_custom_call.1} parent=1 // pred_check
      %p57 = pneg %p56
    $region19: #{tpu_custom_call.1} parent=1 // pred_check_branch
      %59 = sbr.rel (%p57) target = $region21
    $region20: #{tpu_custom_call.1} parent=1 // pred_region
      %60 = vst [vmem:[#allocation7] sm:$0xff] 0.0
      %61 = vst [vmem:[#allocation7 + $0x8] sm:$0xff] 0.0
    $region21: #{tpu_custom_call.1} parent=1 // pred_fallthru
      _
    %v62 = vld [vmem:[#allocation2] sm:$0xff]
    %v63 = vld [vmem:[#allocation2 + $0x8] sm:$0xff]
    %v64 = vld [vmem:[#allocation5] sm:$0xff]
    %v65 = vld [vmem:[#allocation5 + $0x8] sm:$0xff]
    %v66 = vcvt.s32.f32 %v64
    %v67 = vcvt.s32.f32 %v65
    %v68 = vsub.f32 %v62, %v66
    %v69 = vsub.f32 %v63, %v67
    %v70 = vmul.f32 %v68, %v68
    %v71 = vmul.f32 %v69, %v69
    %v72 = vld [vmem:[#allocation7] sm:$0xff]
    %v73 = vld [vmem:[#allocation7 + $0x8] sm:$0xff]
    %v74 = vadd.f32 %v70, 0.0
    %v75 = vadd.f32 %v71, 0.0
    %v76 = vadd.f32 %v72, %v74
    %v77 = vadd.f32 %v73, %v75
    %78 = vst [vmem:[#allocation7] sm:$0xff] %v76
    %79 = vst [vmem:[#allocation7 + $0x8] sm:$0xff] %v77
    // Predicated region
    $region22: #{tpu_custom_call.1} parent=1 // pred_check
      _
    $region23: #{tpu_custom_call.1} parent=1 // pred_check_branch
      %81 = sbr.rel (0) target = $region25
    $region24: #{tpu_custom_call.1} parent=1 // pred_region
      %83 = vsyncadd [#allocation4], 0
      %s84 = sshll.u32 [#allocation7], 4
      %s85 = int_to_ptr.vmem [resolvable:$true] %s84
      %s86 = sshll.u32 %s2, 4
      %s87 = int_to_ptr.hbm [resolvable:$true] %s86
      %92 = dma.vmem_to_hbm [thread:$0]  %s85, 256, %s87, [#allocation4], 128, 128, 8
    $region25: #{tpu_custom_call.1} parent=1 // pred_fallthru
      _
    // Predicated region
    $region26: #{tpu_custom_call.1} parent=1 // pred_check
      _
    $region27: #{tpu_custom_call.1} parent=1 // pred_check_branch
      %94 = sbr.rel (0) target = $region29
    $region28: #{tpu_custom_call.1} parent=1 // pred_region
      %96 = dma.done [#allocation4], 256
    $region29: #{tpu_custom_call.1} parent=1 // pred_fallthru
      _
    %97 = vsyncpa [#allocation3], 1
    %98 = vsyncpa [#allocation6], 1
    %99 = vsyncpa [#allocation4], 1

</llo_original>
